<compile_context>
chip_gen: v7x
topology: tpu7x:2x2x1
jax: 0.10.0
libtpu: 0.0.40
codegen_flags: <defaults>
</compile_context>

<pallas_src>
import functools

import jax
import jax.numpy as jnp
from jax import lax
from jax.experimental import pallas as pl
from jax.experimental.pallas import tpu as pltpu

NEG_SLOPE = 0.01  # nn.LeakyReLU default negative_slope
BN_EPS = 1e-5     # nn.BatchNorm2d default eps


def _leaky(v):
    return jnp.where(v > 0, v, NEG_SLOPE * v)


def fire_kernel(x_ref, w1_ref, w2_ref, w3_ref, b1_ref, b2_ref, b3_ref,
                out_ref, *, H, W):
    # x_ref: (1, Cin, H*W) block for one batch element, channel-major.
    HW = H * W
    Cs = w1_ref.shape[0]
    Ce = w2_ref.shape[0]

    x = x_ref[0].astype(jnp.bfloat16)                         # (Cin, HW)

    # ---- squeeze: 1x1 conv (BN1 scale pre-folded) + bias + LeakyReLU -------
    s = jnp.dot(w1_ref[...], x, preferred_element_type=jnp.float32)
    s = _leaky(s + b1_ref[...])                               # (Cs, HW) f32
    s_bf = s.astype(jnp.bfloat16)

    # ---- expand branch 1: 1x1 conv (BN2 scale pre-folded) + bias -----------
    o1 = jnp.dot(w2_ref[...], s_bf,
                 preferred_element_type=jnp.float32) + b2_ref[...]   # (Ce, HW)

    # ---- expand branch 2: 3x3 conv, pad=1 (BN3 scale pre-folded) + bias ----
    # im2col along the lane axis: for tap (kh, kw) the source pixel of flat
    # position p is p + (kh-1)*W + (kw-1).  Realize each tap with one XLU
    # lane roll of the squeeze activations, zero out positions whose source
    # falls outside the image, then do a single (Ce, 9*Cs) @ (9*Cs, HW) matmul.
    p_idx = lax.broadcasted_iota(jnp.int32, (1, HW), 1)       # flat position
    w_idx = p_idx % W                                         # column index
    row_ok = {-1: p_idx >= W, 0: None, 1: p_idx < HW - W}
    col_ok = {-1: w_idx >= 1, 0: None, 1: w_idx <= W - 2}

    pieces = []
    for kh in range(3):
        dh = kh - 1
        for kw in range(3):
            dw = kw - 1
            delta = dh * W + dw
            piece = s if delta == 0 else pltpu.roll(s, (-delta) % HW, axis=1)
            mask = None
            for m in (row_ok[dh], col_ok[dw]):
                if m is not None:
                    mask = m if mask is None else (mask & m)
            if mask is not None:
                piece = jnp.where(mask, piece, 0.0)
            pieces.append(piece)
    # Cs (=8) f32 rows per piece -> sublane-tile-aligned stacking.
    patch = jnp.concatenate(pieces, axis=0).astype(jnp.bfloat16)   # (9*Cs, HW)
    o2 = jnp.dot(w3_ref[...], patch,
                 preferred_element_type=jnp.float32) + b3_ref[...]   # (Ce, HW)

    # ---- "concat" = two disjoint, lane-dense channel-slab stores + LeakyReLU
    out_ref[0, 0:Ce, :] = _leaky(o1).astype(out_ref.dtype)
    out_ref[0, Ce:2 * Ce, :] = _leaky(o2).astype(out_ref.dtype)


def _fold_bn(bn_params, eps=BN_EPS):
    gamma, beta, mean, var = bn_params
    scale = gamma / jnp.sqrt(var + eps)
    bias = beta - mean * scale
    return scale, bias


def fire_pallas(x_nchw, w1_oihw, w2_oihw, w3_oihw, bn1, bn2, bn3):
    N, Cin, H, W = x_nchw.shape
    Cs = w1_oihw.shape[0]
    Ce = w2_oihw.shape[0]
    HW = H * W

    s1, b1 = _fold_bn(bn1)
    s2, b2 = _fold_bn(bn2)
    s3, b3 = _fold_bn(bn3)

    # Fold BN scales into the conv weights (per output channel == row) and
    # cast to bf16 (MXU input dtype; accumulation stays f32 in the kernel).
    w1 = (w1_oihw[:, :, 0, 0] * s1[:, None]).astype(jnp.bfloat16)   # (Cs, Cin)
    w2 = (w2_oihw[:, :, 0, 0] * s2[:, None]).astype(jnp.bfloat16)   # (Ce, Cs)
    # 3x3 weights pre-packed as one (Ce, 9*Cs) slab; column = tap*Cs + c with
    # tap = kh*3 + kw, matching the kernel's im2col row order.
    w3 = jnp.transpose(w3_oihw, (0, 2, 3, 1)).reshape(Ce, 9 * Cs)
    w3 = (w3 * s3[:, None]).astype(jnp.bfloat16)

    b1c = b1.reshape(Cs, 1).astype(jnp.float32)
    b2c = b2.reshape(Ce, 1).astype(jnp.float32)
    b3c = b3.reshape(Ce, 1).astype(jnp.float32)

    # Free reshape (no transpose): NCHW -> channel-major (N, Cin, H*W).
    x = x_nchw.reshape(N, Cin, HW)

    out = pl.pallas_call(
        functools.partial(fire_kernel, H=H, W=W),
        out_shape=jax.ShapeDtypeStruct((N, 2 * Ce, HW), x_nchw.dtype),
        grid_spec=pltpu.PrefetchScalarGridSpec(
            num_scalar_prefetch=0,
            grid=(N,),
            in_specs=[
                pl.BlockSpec((1, Cin, HW), lambda n: (n, 0, 0)),
                pl.BlockSpec((Cs, Cin), lambda n: (0, 0)),
                pl.BlockSpec((Ce, Cs), lambda n: (0, 0)),
                pl.BlockSpec((Ce, 9 * Cs), lambda n: (0, 0)),
                pl.BlockSpec((Cs, 1), lambda n: (0, 0)),
                pl.BlockSpec((Ce, 1), lambda n: (0, 0)),
                pl.BlockSpec((Ce, 1), lambda n: (0, 0)),
            ],
            out_specs=pl.BlockSpec((1, 2 * Ce, HW), lambda n: (n, 0, 0)),
        ),
        compiler_params=pltpu.CompilerParams(
            dimension_semantics=("parallel",)),   # batch elems independent
    )(x, w1, w2, w3, b1c, b2c, b3c)

    # Free reshape back to NCHW.
    return out.reshape(N, 2 * Ce, H, W)


# --------------------------- pure-JAX reference ------------------------------
def fire_reference(x, w1, w2, w3, bn1, bn2, bn3):
    dn = ('NCHW', 'OIHW', 'NCHW')

    def bn_apply(y, p):
        g, b, m, v = p
        sc = (g / jnp.sqrt(v + BN_EPS)).reshape(1, -1, 1, 1)
        bi = (b - m * g / jnp.sqrt(v + BN_EPS)).reshape(1, -1, 1, 1)
        return y * sc + bi

    s = lax.conv_general_dilated(x, w1, (1, 1), 'VALID', dimension_numbers=dn)
    s = _leaky(bn_apply(s, bn1))
    o1 = lax.conv_general_dilated(s, w2, (1, 1), 'VALID', dimension_numbers=dn)
    o1 = bn_apply(o1, bn2)
    o2 = lax.conv_general_dilated(s, w3, (1, 1), ((1, 1), (1, 1)),
                                  dimension_numbers=dn)
    o2 = bn_apply(o2, bn3)
    return _leaky(jnp.concatenate([o1, o2], axis=1))


if __name__ == "__main__":
    # fire(inplanes=4, squeeze_planes=8, expand_planes=16), input (2, 4, 16, 16)
    N, Cin, H, W = 2, 4, 16, 16
    Cs, Ce = 8, 16

    key = jax.random.PRNGKey(0)
    ks = jax.random.split(key, 16)

    x = jax.random.normal(ks[0], (N, Cin, H, W), jnp.float32)
    w1 = jax.random.normal(ks[1], (Cs, Cin, 1, 1), jnp.float32) * 0.2
    w2 = jax.random.normal(ks[2], (Ce, Cs, 1, 1), jnp.float32) * 0.2
    w3 = jax.random.normal(ks[3], (Ce, Cs, 3, 3), jnp.float32) * 0.1

    def make_bn(kg, kb, km, kv, c):
        gamma = jax.random.uniform(kg, (c,), jnp.float32, 0.5, 1.5)
        beta = jax.random.normal(kb, (c,), jnp.float32) * 0.1
        mean = jax.random.normal(km, (c,), jnp.float32) * 0.1
        var = jax.random.uniform(kv, (c,), jnp.float32, 0.5, 1.5)
        return (gamma, beta, mean, var)

    bn1 = make_bn(ks[4], ks[5], ks[6], ks[7], Cs)
    bn2 = make_bn(ks[8], ks[9], ks[10], ks[11], Ce)
    bn3 = make_bn(ks[12], ks[13], ks[14], ks[15], Ce)

    out = fire_pallas(x, w1, w2, w3, bn1, bn2, bn3)
    out = jax.block_until_ready(out)

    ref = jax.block_until_ready(fire_reference(x, w1, w2, w3, bn1, bn2, bn3))

    assert out.shape == (N, 2 * Ce, H, W), out.shape
    # bf16 MXU operands (f32 accumulation) -> loosened tolerance vs f32 ref.
    assert jnp.allclose(out, ref, atol=5e-2, rtol=5e-2), (
        float(jnp.max(jnp.abs(out - ref))))
    print("KERNEL_OK")
</pallas_src>

<mosaic_0001>
module attributes {stable_mosaic.version = 11 : i64} {
  func.func @fire_kernel(%arg0: i32, %arg1: memref<1x4x256xf32, #tpu.memory_space<vmem>>, %arg2: memref<8x4xbf16, #tpu.memory_space<vmem>>, %arg3: memref<16x8xbf16, #tpu.memory_space<vmem>>, %arg4: memref<16x72xbf16, #tpu.memory_space<vmem>>, %arg5: memref<8x1xf32, #tpu.memory_space<vmem>>, %arg6: memref<16x1xf32, #tpu.memory_space<vmem>>, %arg7: memref<16x1xf32, #tpu.memory_space<vmem>>, %arg8: memref<1x32x256xf32, #tpu.memory_space<vmem>>) attributes {dimension_semantics = [#tpu.dimension_semantics<parallel>], iteration_bounds = array<i64: 2>, scalar_prefetch = 0 : i64, scratch_operands = 0 : i64, tpu.core_type = #tpu.core_type<tc>, window_params = [{transform_indices = @transform_0, window_bounds = array<i64: 1, 4, 256>}, {pipeline_mode = #tpu.pipeline_mode<synchronous>, transform_indices = @transform_1, window_bounds = array<i64: 8, 4>}, {pipeline_mode = #tpu.pipeline_mode<synchronous>, transform_indices = @transform_2, window_bounds = array<i64: 16, 8>}, {pipeline_mode = #tpu.pipeline_mode<synchronous>, transform_indices = @transform_3, window_bounds = array<i64: 16, 72>}, {pipeline_mode = #tpu.pipeline_mode<synchronous>, transform_indices = @transform_4, window_bounds = array<i64: 8, 1>}, {pipeline_mode = #tpu.pipeline_mode<synchronous>, transform_indices = @transform_5, window_bounds = array<i64: 16, 1>}, {pipeline_mode = #tpu.pipeline_mode<synchronous>, transform_indices = @transform_6, window_bounds = array<i64: 16, 1>}, {transform_indices = @transform_7, window_bounds = array<i64: 1, 32, 256>}]} {
    %c0 = arith.constant 0 : index
    %c0_0 = arith.constant 0 : index
    %c0_1 = arith.constant 0 : index
    %0 = vector.load %arg1[%c0, %c0_0, %c0_1] : memref<1x4x256xf32, #tpu.memory_space<vmem>>, vector<1x4x256xf32>
    %1 = vector.shape_cast %0 : vector<1x4x256xf32> to vector<4x256xf32>
    %2 = arith.truncf %1 : vector<4x256xf32> to vector<4x256xbf16>
    %c0_2 = arith.constant 0 : index
    %c0_3 = arith.constant 0 : index
    %3 = vector.load %arg2[%c0_2, %c0_3] : memref<8x4xbf16, #tpu.memory_space<vmem>>, vector<8x4xbf16>
    %cst = arith.constant dense<0.000000e+00> : vector<8x256xf32>
    %4 = tpu.matmul %3, %2, %cst {dimension_numbers = #tpu.dot_dimension_numbers<[1], [0], [0], [1], [0, 0, 1, 1], [], []>} : vector<8x4xbf16>, vector<4x256xbf16>, vector<8x256xf32> -> vector<8x256xf32>
    %c0_4 = arith.constant 0 : index
    %c0_5 = arith.constant 0 : index
    %5 = vector.load %arg5[%c0_4, %c0_5] : memref<8x1xf32, #tpu.memory_space<vmem>>, vector<8x1xf32>
    %6 = vector.broadcast %5 : vector<8x1xf32> to vector<8x256xf32>
    %7 = arith.addf %4, %6 : vector<8x256xf32>
    %cst_6 = arith.constant 0.000000e+00 : f32
    %8 = vector.broadcast %cst_6 : f32 to vector<8x256xf32>
    %9 = arith.cmpf ogt, %7, %8 : vector<8x256xf32>
    %cst_7 = arith.constant 0.00999999977 : f32
    %10 = vector.broadcast %cst_7 : f32 to vector<8x256xf32>
    %11 = arith.mulf %10, %7 : vector<8x256xf32>
    %12 = arith.select %9, %7, %11 : vector<8x256xi1>, vector<8x256xf32>
    %13 = arith.truncf %12 : vector<8x256xf32> to vector<8x256xbf16>
    %c0_8 = arith.constant 0 : index
    %c0_9 = arith.constant 0 : index
    %14 = vector.load %arg3[%c0_8, %c0_9] : memref<16x8xbf16, #tpu.memory_space<vmem>>, vector<16x8xbf16>
    %cst_10 = arith.constant dense<0.000000e+00> : vector<16x256xf32>
    %15 = tpu.matmul %14, %13, %cst_10 {dimension_numbers = #tpu.dot_dimension_numbers<[1], [0], [0], [1], [0, 0, 1, 1], [], []>} : vector<16x8xbf16>, vector<8x256xbf16>, vector<16x256xf32> -> vector<16x256xf32>
    %c0_11 = arith.constant 0 : index
    %c0_12 = arith.constant 0 : index
    %16 = vector.load %arg6[%c0_11, %c0_12] : memref<16x1xf32, #tpu.memory_space<vmem>>, vector<16x1xf32>
    %17 = vector.broadcast %16 : vector<16x1xf32> to vector<16x256xf32>
    %18 = arith.addf %15, %17 : vector<16x256xf32>
    %19 = tpu.iota {dimensions = array<i32: 1>} : vector<1x256xi32>
    %c16_i32 = arith.constant 16 : i32
    %c0_i32 = arith.constant 0 : i32
    %20 = arith.cmpi eq, %c16_i32, %c0_i32 : i32
    %c1_i32 = arith.constant 1 : i32
    %21 = arith.select %20, %c1_i32, %c16_i32 : i32
    %22 = vector.broadcast %21 : i32 to vector<1x256xi32>
    %23 = arith.remsi %19, %22 : vector<1x256xi32>
    %c0_i32_13 = arith.constant 0 : i32
    %24 = vector.broadcast %c0_i32_13 : i32 to vector<1x256xi32>
    %25 = arith.cmpi ne, %23, %24 : vector<1x256xi32>
    %c0_i32_14 = arith.constant 0 : i32
    %26 = vector.broadcast %c0_i32_14 : i32 to vector<1x256xi32>
    %27 = arith.cmpi slt, %23, %26 : vector<1x256xi32>
    %c0_i32_15 = arith.constant 0 : i32
    %28 = arith.cmpi slt, %21, %c0_i32_15 : i32
    %29 = vector.broadcast %28 : i1 to vector<1x256xi1>
    %30 = vector.broadcast %29 : vector<1x256xi1> to vector<1x256xi1>
    %31 = arith.xori %27, %30 : vector<1x256xi1>
    %32 = arith.andi %31, %25 : vector<1x256xi1>
    %33 = vector.broadcast %21 : i32 to vector<1x256xi32>
    %34 = arith.addi %23, %33 : vector<1x256xi32>
    %35 = arith.select %32, %34, %23 : vector<1x256xi1>, vector<1x256xi32>
    %c16_i32_16 = arith.constant 16 : i32
    %36 = vector.broadcast %c16_i32_16 : i32 to vector<1x256xi32>
    %37 = arith.cmpi sge, %19, %36 : vector<1x256xi32>
    %c240_i32 = arith.constant 240 : i32
    %38 = vector.broadcast %c240_i32 : i32 to vector<1x256xi32>
    %39 = arith.cmpi slt, %19, %38 : vector<1x256xi32>
    %c1_i32_17 = arith.constant 1 : i32
    %40 = vector.broadcast %c1_i32_17 : i32 to vector<1x256xi32>
    %41 = arith.cmpi sge, %35, %40 : vector<1x256xi32>
    %c14_i32 = arith.constant 14 : i32
    %42 = vector.broadcast %c14_i32 : i32 to vector<1x256xi32>
    %43 = arith.cmpi sle, %35, %42 : vector<1x256xi32>
    %c17_i32 = arith.constant 17 : i32
    %44 = tpu.dynamic_rotate %12 by %c17_i32 dim 1 : vector<8x256xf32>, i32 -> vector<8x256xf32>
    %45 = arith.andi %37, %41 : vector<1x256xi1>
    %cst_18 = arith.constant 0.000000e+00 : f32
    %46 = vector.shape_cast %45 : vector<1x256xi1> to vector<1x256xi1>
    %47 = vector.broadcast %46 : vector<1x256xi1> to vector<8x256xi1>
    %48 = vector.broadcast %cst_18 : f32 to vector<8x256xf32>
    %49 = arith.select %47, %44, %48 : vector<8x256xi1>, vector<8x256xf32>
    %c16_i32_19 = arith.constant 16 : i32
    %50 = tpu.dynamic_rotate %12 by %c16_i32_19 dim 1 : vector<8x256xf32>, i32 -> vector<8x256xf32>
    %cst_20 = arith.constant 0.000000e+00 : f32
    %51 = vector.shape_cast %37 : vector<1x256xi1> to vector<1x256xi1>
    %52 = vector.broadcast %51 : vector<1x256xi1> to vector<8x256xi1>
    %53 = vector.broadcast %cst_20 : f32 to vector<8x256xf32>
    %54 = arith.select %52, %50, %53 : vector<8x256xi1>, vector<8x256xf32>
    %c15_i32 = arith.constant 15 : i32
    %55 = tpu.dynamic_rotate %12 by %c15_i32 dim 1 : vector<8x256xf32>, i32 -> vector<8x256xf32>
    %56 = arith.andi %37, %43 : vector<1x256xi1>
    %cst_21 = arith.constant 0.000000e+00 : f32
    %57 = vector.shape_cast %56 : vector<1x256xi1> to vector<1x256xi1>
    %58 = vector.broadcast %57 : vector<1x256xi1> to vector<8x256xi1>
    %59 = vector.broadcast %cst_21 : f32 to vector<8x256xf32>
    %60 = arith.select %58, %55, %59 : vector<8x256xi1>, vector<8x256xf32>
    %c1_i32_22 = arith.constant 1 : i32
    %61 = tpu.dynamic_rotate %12 by %c1_i32_22 dim 1 : vector<8x256xf32>, i32 -> vector<8x256xf32>
    %cst_23 = arith.constant 0.000000e+00 : f32
    %62 = vector.shape_cast %41 : vector<1x256xi1> to vector<1x256xi1>
    %63 = vector.broadcast %62 : vector<1x256xi1> to vector<8x256xi1>
    %64 = vector.broadcast %cst_23 : f32 to vector<8x256xf32>
    %65 = arith.select %63, %61, %64 : vector<8x256xi1>, vector<8x256xf32>
    %c255_i32 = arith.constant 255 : i32
    %66 = tpu.dynamic_rotate %12 by %c255_i32 dim 1 : vector<8x256xf32>, i32 -> vector<8x256xf32>
    %cst_24 = arith.constant 0.000000e+00 : f32
    %67 = vector.shape_cast %43 : vector<1x256xi1> to vector<1x256xi1>
    %68 = vector.broadcast %67 : vector<1x256xi1> to vector<8x256xi1>
    %69 = vector.broadcast %cst_24 : f32 to vector<8x256xf32>
    %70 = arith.select %68, %66, %69 : vector<8x256xi1>, vector<8x256xf32>
    %c241_i32 = arith.constant 241 : i32
    %71 = tpu.dynamic_rotate %12 by %c241_i32 dim 1 : vector<8x256xf32>, i32 -> vector<8x256xf32>
    %72 = arith.andi %39, %41 : vector<1x256xi1>
    %cst_25 = arith.constant 0.000000e+00 : f32
    %73 = vector.shape_cast %72 : vector<1x256xi1> to vector<1x256xi1>
    %74 = vector.broadcast %73 : vector<1x256xi1> to vector<8x256xi1>
    %75 = vector.broadcast %cst_25 : f32 to vector<8x256xf32>
    %76 = arith.select %74, %71, %75 : vector<8x256xi1>, vector<8x256xf32>
    %c240_i32_26 = arith.constant 240 : i32
    %77 = tpu.dynamic_rotate %12 by %c240_i32_26 dim 1 : vector<8x256xf32>, i32 -> vector<8x256xf32>
    %cst_27 = arith.constant 0.000000e+00 : f32
    %78 = vector.shape_cast %39 : vector<1x256xi1> to vector<1x256xi1>
    %79 = vector.broadcast %78 : vector<1x256xi1> to vector<8x256xi1>
    %80 = vector.broadcast %cst_27 : f32 to vector<8x256xf32>
    %81 = arith.select %79, %77, %80 : vector<8x256xi1>, vector<8x256xf32>
    %c239_i32 = arith.constant 239 : i32
    %82 = tpu.dynamic_rotate %12 by %c239_i32 dim 1 : vector<8x256xf32>, i32 -> vector<8x256xf32>
    %83 = arith.andi %39, %43 : vector<1x256xi1>
    %cst_28 = arith.constant 0.000000e+00 : f32
    %84 = vector.shape_cast %83 : vector<1x256xi1> to vector<1x256xi1>
    %85 = vector.broadcast %84 : vector<1x256xi1> to vector<8x256xi1>
    %86 = vector.broadcast %cst_28 : f32 to vector<8x256xf32>
    %87 = arith.select %85, %82, %86 : vector<8x256xi1>, vector<8x256xf32>
    %88 = tpu.concatenate %49, %54, %60, %65, %12, %70, %76, %81, %87 in 0 : vector<8x256xf32>, vector<8x256xf32>, vector<8x256xf32>, vector<8x256xf32>, vector<8x256xf32>, vector<8x256xf32>, vector<8x256xf32>, vector<8x256xf32>, vector<8x256xf32> -> vector<72x256xf32>
    %89 = arith.truncf %88 : vector<72x256xf32> to vector<72x256xbf16>
    %c0_29 = arith.constant 0 : index
    %c0_30 = arith.constant 0 : index
    %90 = vector.load %arg4[%c0_29, %c0_30] : memref<16x72xbf16, #tpu.memory_space<vmem>>, vector<16x72xbf16>
    %cst_31 = arith.constant dense<0.000000e+00> : vector<16x256xf32>
    %91 = tpu.matmul %90, %89, %cst_31 {dimension_numbers = #tpu.dot_dimension_numbers<[1], [0], [0], [1], [0, 0, 1, 1], [], []>} : vector<16x72xbf16>, vector<72x256xbf16>, vector<16x256xf32> -> vector<16x256xf32>
    %c0_32 = arith.constant 0 : index
    %c0_33 = arith.constant 0 : index
    %92 = vector.load %arg7[%c0_32, %c0_33] : memref<16x1xf32, #tpu.memory_space<vmem>>, vector<16x1xf32>
    %93 = vector.broadcast %92 : vector<16x1xf32> to vector<16x256xf32>
    %94 = arith.addf %91, %93 : vector<16x256xf32>
    %cst_34 = arith.constant 0.000000e+00 : f32
    %95 = vector.broadcast %cst_34 : f32 to vector<16x256xf32>
    %96 = arith.cmpf ogt, %18, %95 : vector<16x256xf32>
    %cst_35 = arith.constant 0.00999999977 : f32
    %97 = vector.broadcast %cst_35 : f32 to vector<16x256xf32>
    %98 = arith.mulf %97, %18 : vector<16x256xf32>
    %99 = arith.select %96, %18, %98 : vector<16x256xi1>, vector<16x256xf32>
    %c0_36 = arith.constant 0 : index
    %c0_37 = arith.constant 0 : index
    %c0_38 = arith.constant 0 : index
    %100 = vector.load %arg8[%c0_36, %c0_37, %c0_38] : memref<1x32x256xf32, #tpu.memory_space<vmem>>, vector<1x16x256xf32>
    %101 = vector.shape_cast %100 : vector<1x16x256xf32> to vector<16x256xf32>
    %102 = vector.shape_cast %99 : vector<16x256xf32> to vector<1x16x256xf32>
    tpu.vector_store %arg8[%c0_36, %c0_37, %c0_38], %102 {strides = array<i32>} : memref<1x32x256xf32, #tpu.memory_space<vmem>>, vector<1x16x256xf32>,
    %cst_39 = arith.constant 0.000000e+00 : f32
    %103 = vector.broadcast %cst_39 : f32 to vector<16x256xf32>
    %104 = arith.cmpf ogt, %94, %103 : vector<16x256xf32>
    %cst_40 = arith.constant 0.00999999977 : f32
    %105 = vector.broadcast %cst_40 : f32 to vector<16x256xf32>
    %106 = arith.mulf %105, %94 : vector<16x256xf32>
    %107 = arith.select %104, %94, %106 : vector<16x256xi1>, vector<16x256xf32>
    %c0_41 = arith.constant 0 : index
    %c16 = arith.constant 16 : index
    %c0_42 = arith.constant 0 : index
    %108 = vector.load %arg8[%c0_41, %c16, %c0_42] : memref<1x32x256xf32, #tpu.memory_space<vmem>>, vector<1x16x256xf32>
    %109 = vector.shape_cast %108 : vector<1x16x256xf32> to vector<16x256xf32>
    %110 = vector.shape_cast %107 : vector<16x256xf32> to vector<1x16x256xf32>
    tpu.vector_store %arg8[%c0_41, %c16, %c0_42], %110 {strides = array<i32>} : memref<1x32x256xf32, #tpu.memory_space<vmem>>, vector<1x16x256xf32>,
    return
  }
  func.func @transform_0(%arg0: i32) -> (i32, i32, i32) {
    %c0_i32 = arith.constant 0 : i32
    %c0_i32_0 = arith.constant 0 : i32
    %c0_i32_1 = arith.constant 0 : i32
    return %arg0, %c0_i32, %c0_i32_0 : i32, i32, i32
  }
  func.func @transform_1(%arg0: i32) -> (i32, i32) {
    %c0_i32 = arith.constant 0 : i32
    %c0_i32_0 = arith.constant 0 : i32
    %c0_i32_1 = arith.constant 0 : i32
    return %c0_i32, %c0_i32_0 : i32, i32
  }
  func.func @transform_2(%arg0: i32) -> (i32, i32) {
    %c0_i32 = arith.constant 0 : i32
    %c0_i32_0 = arith.constant 0 : i32
    %c0_i32_1 = arith.constant 0 : i32
    return %c0_i32, %c0_i32_0 : i32, i32
  }
  func.func @transform_3(%arg0: i32) -> (i32, i32) {
    %c0_i32 = arith.constant 0 : i32
    %c0_i32_0 = arith.constant 0 : i32
    %c0_i32_1 = arith.constant 0 : i32
    return %c0_i32, %c0_i32_0 : i32, i32
  }
  func.func @transform_4(%arg0: i32) -> (i32, i32) {
    %c0_i32 = arith.constant 0 : i32
    %c0_i32_0 = arith.constant 0 : i32
    %c0_i32_1 = arith.constant 0 : i32
    return %c0_i32, %c0_i32_0 : i32, i32
  }
  func.func @transform_5(%arg0: i32) -> (i32, i32) {
    %c0_i32 = arith.constant 0 : i32
    %c0_i32_0 = arith.constant 0 : i32
    %c0_i32_1 = arith.constant 0 : i32
    return %c0_i32, %c0_i32_0 : i32, i32
  }
  func.func @transform_6(%arg0: i32) -> (i32, i32) {
    %c0_i32 = arith.constant 0 : i32
    %c0_i32_0 = arith.constant 0 : i32
    %c0_i32_1 = arith.constant 0 : i32
    return %c0_i32, %c0_i32_0 : i32, i32
  }
  func.func @transform_7(%arg0: i32) -> (i32, i32, i32) {
    %c0_i32 = arith.constant 0 : i32
    %c0_i32_0 = arith.constant 0 : i32
    %c0_i32_1 = arith.constant 0 : i32
    return %arg0, %c0_i32, %c0_i32_0 : i32, i32, i32
  }
}

</mosaic_0001>

<llo_original>
// kernel: tpu_custom_call.1
$region0: #{tpu_custom_call.1}
  #allocation0 [shape = 'u32[]', space=smem, size = 0x4, offset = 0x4, fixed_abs, tag = 'smem constant byte address 0x4 - core index']
  #allocation1 [shape = 'u32[144,128]{1,0:T(1,128)}', space=vmem, size = 0x12000, scoped, tag = 'internal scratch']
  %s0 = inlined_call_operand.vmem [shape: f32[2,4,256], index: 0, kind: input, shape index: {}]
  %s1 = inlined_call_operand.vmem [shape: bf16[8,4], index: 1, kind: input, shape index: {}]
  %s2 = inlined_call_operand.vmem [shape: bf16[16,8], index: 2, kind: input, shape index: {}]
  %s3 = inlined_call_operand.vmem [shape: bf16[16,72], index: 3, kind: input, shape index: {}]
  %s4 = inlined_call_operand.vmem [shape: f32[8,1], index: 4, kind: input, shape index: {}]
  %s5 = inlined_call_operand.vmem [shape: f32[16,1], index: 5, kind: input, shape index: {}]
  %s6 = inlined_call_operand.vmem [shape: f32[16,1], index: 6, kind: input, shape index: {}]
  %s7 = inlined_call_operand.hbm [shape: f32[2,32,256], index: 7, kind: output, shape index: {}]
  %s8 = sld [smem:[#allocation0]]
  $region61: #{tpu_custom_call.1} parent=0
    _
  %s10 = ssub.s32 1, %s8
  %s11 = scalar_select 0, %s10, %s8
  $region1: #{tpu_custom_call.1} parent=0
    #allocation2 [shape = 'u8[65536]{0}', space=vmem, size = 0x10000, scoped, tag = 'output window, operand 0']
    #allocation3 [shape = 's32[2]{0}', space=sflag, size = 0x8, scoped, tag = 'scoped memory for tpu_custom_call.1']
    %12 = vsyncpa [#allocation3], 0
    %s13 = scalar_lea.sflag [#allocation3], 1
    %14 = vsyncpa %s13, 0
    loop: start=0, step=1, limit=4
    $region2: #{tpu_custom_call.1} parent=1 // loop_pre_header
      _
    $region3: #{tpu_custom_call.1} parent=1 // loop_header
      %s16 = sphi 0, %s20
      %p17 = scmp.ge.s32.totalorder %s16, 4
      %s26 = sphi 0, %s28
      %s29 = sphi 0, %s26
      %s30 = sphi 0, %s29
      %s46 = sphi 0, %s30
      %s50 = sphi 0, %s50
      %s52 = sphi 0, %s50
      %s53 = sphi 0, %s52
      %s67 = sphi 0, %s53
      %s71 = sphi 0, %s71
      %s73 = sphi 0, %s71
      %s74 = sphi 0, %s73
      %s88 = sphi 0, %s74
      %s92 = sphi 0, %s92
      %s94 = sphi 0, %s92
      %s95 = sphi 0, %s94
      %s109 = sphi 0, %s95
      %s113 = sphi 0, %s113
      %s115 = sphi 0, %s113
      %s116 = sphi 0, %s115
      %s130 = sphi 0, %s116
      %s134 = sphi 0, %s134
      %s136 = sphi 0, %s134
      %s137 = sphi 0, %s136
      %s151 = sphi 0, %s137
      %s155 = sphi 0, %s155
      %s157 = sphi 0, %s155
      %s158 = sphi 0, %s157
      %s172 = sphi 0, %s158
      %s178 = sphi 0, %s180
      %s181 = sphi 0, %s178
      %s182 = sphi 0, %s181
      %s198 = sphi 0, %s182
    $region4: #{tpu_custom_call.1} parent=1 // loop_header_branch
      %19 = sbr.rel (%p17) target = $region8
    $region5: #{tpu_custom_call.1} parent=1 // loop_body
      %s21 = ssub.s32 %s16, 1
      %s22 = ssub.s32 %s16, 2
      %s23 = sadd.s32 %s16, 1
      %s24 = ssub.s32 %s16, %s23
      %p25 = scmp.eq.s32.totalorder %s24, 0
      %s27 = sadd.s32 %s26, 1
      %s28 = scalar_select %p25, %s26, %s27
      %p31 = pneg %p25
      %p32 = scmp.eq.s32.totalorder %s16, 1
      %p33 = por %p31, %p32
      %p34 = scmp.ne.s32.totalorder %s26, %s29
      %p35 = scmp.eq.s32.totalorder %s16, 0
      %p36 = por %p34, %p35
      %p37 = scmp.ne.s32.totalorder %s26, %s29
      %p38 = scmp.eq.s32.totalorder %s21, 1
      %p39 = por %p37, %p38
      %p40 = scmp.ne.s32.totalorder %s29, %s30
      %p41 = scmp.eq.s32.totalorder %s21, 0
      %p42 = por %p40, %p41
      %p43 = scmp.ne.s32.totalorder %s29, %s30
      %p44 = scmp.eq.s32.totalorder %s22, 1
      %p45 = por %p43, %p44
      %p47 = scmp.ne.s32.totalorder %s30, %s46
      %p48 = scmp.eq.s32.totalorder %s22, 0
      %p49 = por %p47, %p48
      %s51 = sadd.s32 %s50, 1
      %p54 = scmp.eq.s32.totalorder %s16, 1
      %p55 = scmp.ne.s32.totalorder %s50, %s52
      %p56 = scmp.eq.s32.totalorder %s16, 0
      %p57 = por %p55, %p56
      %p58 = scmp.ne.s32.totalorder %s50, %s52
      %p59 = scmp.eq.s32.totalorder %s21, 1
      %p60 = por %p58, %p59
      %p61 = scmp.ne.s32.totalorder %s52, %s53
      %p62 = scmp.eq.s32.totalorder %s21, 0
      %p63 = por %p61, %p62
      %p64 = scmp.ne.s32.totalorder %s52, %s53
      %p65 = scmp.eq.s32.totalorder %s22, 1
      %p66 = por %p64, %p65
      %p68 = scmp.ne.s32.totalorder %s53, %s67
      %p69 = scmp.eq.s32.totalorder %s22, 0
      %p70 = por %p68, %p69
      %s72 = sadd.s32 %s71, 1
      %p75 = scmp.eq.s32.totalorder %s16, 1
      %p76 = scmp.ne.s32.totalorder %s71, %s73
      %p77 = scmp.eq.s32.totalorder %s16, 0
      %p78 = por %p76, %p77
      %p79 = scmp.ne.s32.totalorder %s71, %s73
      %p80 = scmp.eq.s32.totalorder %s21, 1
      %p81 = por %p79, %p80
      %p82 = scmp.ne.s32.totalorder %s73, %s74
      %p83 = scmp.eq.s32.totalorder %s21, 0
      %p84 = por %p82, %p83
      %p85 = scmp.ne.s32.totalorder %s73, %s74
      %p86 = scmp.eq.s32.totalorder %s22, 1
      %p87 = por %p85, %p86
      %p89 = scmp.ne.s32.totalorder %s74, %s88
      %p90 = scmp.eq.s32.totalorder %s22, 0
      %p91 = por %p89, %p90
      %s93 = sadd.s32 %s92, 1
      %p96 = scmp.eq.s32.totalorder %s16, 1
      %p97 = scmp.ne.s32.totalorder %s92, %s94
      %p98 = scmp.eq.s32.totalorder %s16, 0
      %p99 = por %p97, %p98
      %p100 = scmp.ne.s32.totalorder %s92, %s94
      %p101 = scmp.eq.s32.totalorder %s21, 1
      %p102 = por %p100, %p101
      %p103 = scmp.ne.s32.totalorder %s94, %s95
      %p104 = scmp.eq.s32.totalorder %s21, 0
      %p105 = por %p103, %p104
      %p106 = scmp.ne.s32.totalorder %s94, %s95
      %p107 = scmp.eq.s32.totalorder %s22, 1
      %p108 = por %p106, %p107
      %p110 = scmp.ne.s32.totalorder %s95, %s109
      %p111 = scmp.eq.s32.totalorder %s22, 0
      %p112 = por %p110, %p111
      %s114 = sadd.s32 %s113, 1
      %p117 = scmp.eq.s32.totalorder %s16, 1
      %p118 = scmp.ne.s32.totalorder %s113, %s115
      %p119 = scmp.eq.s32.totalorder %s16, 0
      %p120 = por %p118, %p119
      %p121 = scmp.ne.s32.totalorder %s113, %s115
      %p122 = scmp.eq.s32.totalorder %s21, 1
      %p123 = por %p121, %p122
      %p124 = scmp.ne.s32.totalorder %s115, %s116
      %p125 = scmp.eq.s32.totalorder %s21, 0
      %p126 = por %p124, %p125
      %p127 = scmp.ne.s32.totalorder %s115, %s116
      %p128 = scmp.eq.s32.totalorder %s22, 1
      %p129 = por %p127, %p128
      %p131 = scmp.ne.s32.totalorder %s116, %s130
      %p132 = scmp.eq.s32.totalorder %s22, 0
      %p133 = por %p131, %p132
      %s135 = sadd.s32 %s134, 1
      %p138 = scmp.eq.s32.totalorder %s16, 1
      %p139 = scmp.ne.s32.totalorder %s134, %s136
      %p140 = scmp.eq.s32.totalorder %s16, 0
      %p141 = por %p139, %p140
      %p142 = scmp.ne.s32.totalorder %s134, %s136
      %p143 = scmp.eq.s32.totalorder %s21, 1
      %p144 = por %p142, %p143
      %p145 = scmp.ne.s32.totalorder %s136, %s137
      %p146 = scmp.eq.s32.totalorder %s21, 0
      %p147 = por %p145, %p146
      %p148 = scmp.ne.s32.totalorder %s136, %s137
      %p149 = scmp.eq.s32.totalorder %s22, 1
      %p150 = por %p148, %p149
      %p152 = scmp.ne.s32.totalorder %s137, %s151
      %p153 = scmp.eq.s32.totalorder %s22, 0
      %p154 = por %p152, %p153
      %s156 = sadd.s32 %s155, 1
      %p159 = scmp.eq.s32.totalorder %s16, 1
      %p160 = scmp.ne.s32.totalorder %s155, %s157
      %p161 = scmp.eq.s32.totalorder %s16, 0
      %p162 = por %p160, %p161
      %p163 = scmp.ne.s32.totalorder %s155, %s157
      %p164 = scmp.eq.s32.totalorder %s21, 1
      %p165 = por %p163, %p164
      %p166 = scmp.ne.s32.totalorder %s157, %s158
      %p167 = scmp.eq.s32.totalorder %s21, 0
      %p168 = por %p166, %p167
      %p169 = scmp.ne.s32.totalorder %s157, %s158
      %p170 = scmp.eq.s32.totalorder %s22, 1
      %p171 = por %p169, %p170
      %p173 = scmp.ne.s32.totalorder %s158, %s172
      %p174 = scmp.eq.s32.totalorder %s22, 0
      %p175 = por %p173, %p174
      %s176 = ssub.s32 %s16, %s23
      %p177 = scmp.eq.s32.totalorder %s176, 0
      %s179 = sadd.s32 %s178, 1
      %s180 = scalar_select %p177, %s178, %s179
      %p183 = pneg %p177
      %p184 = scmp.eq.s32.totalorder %s16, 1
      %p185 = por %p183, %p184
      %p186 = scmp.ne.s32.totalorder %s178, %s181
      %p187 = scmp.eq.s32.totalorder %s16, 0
      %p188 = por %p186, %p187
      %p189 = scmp.ne.s32.totalorder %s178, %s181
      %p190 = scmp.eq.s32.totalorder %s21, 1
      %p191 = por %p189, %p190
      %p192 = scmp.ne.s32.totalorder %s181, %s182
      %p193 = scmp.eq.s32.totalorder %s21, 0
      %p194 = por %p192, %p193
      %p195 = scmp.ne.s32.totalorder %s181, %s182
      %p196 = scmp.eq.s32.totalorder %s22, 1
      %p197 = por %p195, %p196
      %p199 = scmp.ne.s32.totalorder %s182, %s198
      %p200 = scmp.eq.s32.totalorder %s22, 0
      %p201 = por %p199, %p200
      %p202 = scmp.le.s32.totalorder 1, %s16
      %p203 = scmp.lt.s32.totalorder %s16, 3
      %p204 = pnand %p202, %p203
      %p205 = pneg %p204
      // Predicated region
      $region9: #{tpu_custom_call.1} parent=5 // pred_check
        _
      $region10: #{tpu_custom_call.1} parent=5 // pred_check_branch
        %207 = sbr.rel (%p204) target = $region12
      $region11: #{tpu_custom_call.1} parent=5 // pred_region
        %s208 = ssub.s32 %s16, 1
        // Predicated region
        $region13: #{tpu_custom_call.1} parent=11 // pred_check
          %p209 = pneg %p63
        $region14: #{tpu_custom_call.1} parent=11 // pred_check_branch
          %211 = sbr.rel (%p209) target = $region16
        $region15: #{tpu_custom_call.1} parent=11 // pred_region
          _
        $region16: #{tpu_custom_call.1} parent=11 // pred_fallthru
          _
        // Predicated region
        $region17: #{tpu_custom_call.1} parent=11 // pred_check
          %p212 = pneg %p84
        $region18: #{tpu_custom_call.1} parent=11 // pred_check_branch
          %214 = sbr.rel (%p212) target = $region20
        $region19: #{tpu_custom_call.1} parent=11 // pred_region
          _
        $region20: #{tpu_custom_call.1} parent=11 // pred_fallthru
          _
        // Predicated region
        $region21: #{tpu_custom_call.1} parent=11 // pred_check
          %p215 = pneg %p105
        $region22: #{tpu_custom_call.1} parent=11 // pred_check_branch
          %217 = sbr.rel (%p215) target = $region24
        $region23: #{tpu_custom_call.1} parent=11 // pred_region
          _
        $region24: #{tpu_custom_call.1} parent=11 // pred_fallthru
          _
        // Predicated region
        $region25: #{tpu_custom_call.1} parent=11 // pred_check
          %p218 = pneg %p126
        $region26: #{tpu_custom_call.1} parent=11 // pred_check_branch
          %220 = sbr.rel (%p218) target = $region28
        $region27: #{tpu_custom_call.1} parent=11 // pred_region
          _
        $region28: #{tpu_custom_call.1} parent=11 // pred_fallthru
          _
        // Predicated region
        $region29: #{tpu_custom_call.1} parent=11 // pred_check
          %p221 = pneg %p147
        $region30: #{tpu_custom_call.1} parent=11 // pred_check_branch
          %223 = sbr.rel (%p221) target = $region32
        $region31: #{tpu_custom_call.1} parent=11 // pred_region
          _
        $region32: #{tpu_custom_call.1} parent=11 // pred_fallthru
          _
        // Predicated region
        $region33: #{tpu_custom_call.1} parent=11 // pred_check
          %p224 = pneg %p168
        $region34: #{tpu_custom_call.1} parent=11 // pred_check_branch
          %226 = sbr.rel (%p224) target = $region36
        $region35: #{tpu_custom_call.1} parent=11 // pred_region
          _
        $region36: #{tpu_custom_call.1} parent=11 // pred_fallthru
          _
      $region12: #{tpu_custom_call.1} parent=5 // pred_fallthru
        _
      %p227 = scmp.lt.s32.totalorder %s16, 2
      // Predicated region
      $region37: #{tpu_custom_call.1} parent=5 // pred_check
        %p228 = pneg %p227
      $region38: #{tpu_custom_call.1} parent=5 // pred_check_branch
        %230 = sbr.rel (%p228) target = $region40
      $region39: #{tpu_custom_call.1} parent=5 // pred_region
        // Predicated region
        $region41: #{tpu_custom_call.1} parent=39 // pred_check
          %p231 = pneg %p36
        $region42: #{tpu_custom_call.1} parent=39 // pred_check_branch
          %233 = sbr.rel (%p231) target = $region44
        $region43: #{tpu_custom_call.1} parent=39 // pred_region
          %p234 = scmp.lt.s32.totalorder %s16, 1
          %s235 = scalar_select %p234, %s16, 1
          %s236 = smul.addr %s235, 2
          %s237 = smul.addr %s236, 4
          %s238 = scalar_lea.vmem %s0, %s237
        $region44: #{tpu_custom_call.1} parent=39 // pred_fallthru
          _
      $region40: #{tpu_custom_call.1} parent=5 // pred_fallthru
        _
      %p239 = scmp.le.s32.totalorder 1, %s16
      %p240 = scmp.lt.s32.totalorder %s16, 3
      %p241 = pnand %p239, %p240
      %p242 = pneg %p241
      // Predicated region
      $region45: #{tpu_custom_call.1} parent=5 // pred_check
        _
      $region46: #{tpu_custom_call.1} parent=5 // pred_check_branch
        %244 = sbr.rel (%p241) target = $region48
      $region47: #{tpu_custom_call.1} parent=5 // pred_region
        %s245 = ssub.s32 %s16, 1
        %p246 = scmp.lt.s32.totalorder %s21, 1
        %s247 = scalar_select %p246, %s21, 1
        %s248 = smul.addr %s247, 2
        %s249 = smul.addr %s248, 4
        %s250 = scalar_lea.vmem %s0, %s249
        %p251 = pneg %p42
        %p252 = pneg %p39
        %p253 = pneg %p63
        %p254 = pneg %p60
        %p255 = pneg %p84
        %p256 = pneg %p81
        %p257 = pneg %p105
        %p258 = pneg %p102
        %p259 = pneg %p126
        %p260 = pneg %p123
        %p261 = pneg %p147
        %p262 = pneg %p144
        %p263 = pneg %p168
        %p264 = pneg %p165
        %p265 = pneg %p194
        %p266 = pneg %p191
        %s267 = sand.u32 %s181, 1
        %s268 = scalar_lea.sflag [#allocation3], %s267
        %s269 = sand.u32 %s181, 1
        %s270 = smul.addr %s269, 64
        %s271 = scalar_lea.vmem [#allocation2], %s270
        %p272 = scmp.lt.s32.totalorder %s21, 1
        %s273 = scalar_select %p272, %s21, 1
        %s274 = smul.addr %s273, 2
        %s275 = smul.addr %s274, 4
        %s276 = scalar_lea.vmem %s0, %s275
        %v278 = vld [vmem:[%s276] sm:$0xff]
        %v280 = vcombine.high %v278, %v278
        %v282 = vpack.c.bf16 %v278, %v278
        %v283 = vpack.c.bf16 %v280, %v280
        %v284 = vld [vmem:[%s1] sm:$0xf]
        %v285 = vld [vmem:[%s4] sm:$0xff]
        %287 = vset.pattern.permute.xlu0 0
        %288 = vperm.xlu0 %287, %v285
        %v289 = vpop.permute.xlu0 %288
        %vm291 = vcmask 31744
        %v293 = vsel %vm291, %v284, 0
        %vm295 = vcmask 1041408
        %v297 = vsel %vm295, %v282, 0
        %v300 = vsel %vm295, %v283, 0
        %302 = vmatprep.subr.bf16.mxu0 %v300
        %303 = vmatpush1.bf16.msra.mxu0 %v297
        %304 = vmatprep.subr.bf16.mxu0 0
        %305 = vmatpush1.bf16.msra.mxu0 0
        %306 = vmatprep.subr.bf16.mxu0 0
        %307 = vmatpush1.bf16.msra.mxu0 0
        %308 = vmatprep.subr.bf16.mxu0 0
        %309 = vmatpush1.bf16.msra.mxu0 0
        %310 = vmatprep.subr.bf16.mxu0 0
        %311 = vmatpush1.bf16.msra.mxu0 0
        %312 = vmatprep.subr.bf16.mxu0 0
        %313 = vmatpush1.bf16.msra.mxu0 0
        %314 = vmatprep.subr.bf16.mxu0 0
        %315 = vmatpush1.bf16.msra.mxu0 0
        %316 = vmatprep.subr.bf16.mxu0 0
        %317 = vmatpush1.bf16.msra.mxu0 0
        %318 = vmatprep.subr.bf16.mxu0 0
        %319 = vmatpush1.bf16.msra.mxu0 0
        %320 = vmatprep.subr.bf16.mxu0 0
        %321 = vmatpush1.bf16.msra.mxu0 0
        %322 = vmatprep.subr.bf16.mxu0 0
        %323 = vmatpush1.bf16.msra.mxu0 0
        %324 = vmatprep.subr.bf16.mxu0 0
        %325 = vmatpush1.bf16.msra.mxu0 0
        %326 = vmatprep.subr.bf16.mxu0 0
        %327 = vmatpush1.bf16.msra.mxu0 0
        %328 = vmatprep.subr.bf16.mxu0 0
        %329 = vmatpush1.bf16.msra.mxu0 0
        %330 = vmatprep.subr.bf16.mxu0 0
        %331 = vmatpush1.bf16.msra.mxu0 0
        %332 = vmatprep.subr.bf16.mxu0 0
        %333 = vmatpush1.bf16.msra.mxu0 0
        %334 = vmatprep.mubr.bf16.mxu0 0
        %335 = vmatmul.mubr.bf16.gmra.mrb[0].mxu0 %v293
        %v336 = vpop.f32.mrb[0].mxu0
        %v337 = vadd.f32 %v289, %v336
        %v338 = vpop.f32.mrb[0].mxu0
        %v339 = vadd.f32 %v289, %v338
        %v340 = vpop.f32.mrb[0].mxu0
        %v341 = vpop.f32.mrb[0].mxu0
        %342 = vdwg.mxu0
        %vm343 = vcmp.gt.f32.partialorder %v337, 0.0
        %vm344 = vcmp.gt.f32.partialorder %v339, 0.0
        %v345 = vmul.f32 %v337, 0.01
        %v346 = vmul.f32 %v339, 0.01
        %v347 = vsel %vm343, %v337, %v345
        %v348 = vsel %vm344, %v339, %v346
        %v349 = vpack.c.bf16 %v347, %v347
        %v350 = vpack.c.bf16 %v348, %v348
        %v351 = vld [vmem:[%s2] sm:$0xf]
        %v352 = vld [vmem:[%s2 + $0x4] sm:$0xf]
        %v353 = vld [vmem:[%s5] sm:$0xff]
        %v354 = vld [vmem:[%s5 + $0x8] sm:$0xff]
        %356 = vset.pattern.permute.xlu0 0
        %357 = vperm.xlu0 %356, %v353
        %v358 = vpop.permute.xlu0 %357
        %361 = vset.pattern.permute.xlu0 0
        %362 = vperm.xlu0 %361, %v354
        %v363 = vpop.permute.xlu0 %362
        %v367 = vunpack.c.l.b16 %v351
        %v368 = vunpack.c.l.b16 %v352
        %v369 = vpack.c.b16 %v368, %v367
        %vm370 = vcmask 64512
        %v372 = vsel %vm370, %v369, 0
        %vm374 = vcmask 1043456
        %v376 = vsel %vm374, %v349, 0
        %v379 = vsel %vm374, %v350, 0
        %381 = vmatprep.subr.bf16.mxu0 %v379
        %382 = vmatpush1.bf16.msra.mxu0 %v376
        %383 = vmatprep.subr.bf16.mxu0 0
        %384 = vmatpush1.bf16.msra.mxu0 0
        %385 = vmatprep.subr.bf16.mxu0 0
        %386 = vmatpush1.bf16.msra.mxu0 0
        %387 = vmatprep.subr.bf16.mxu0 0
        %388 = vmatpush1.bf16.msra.mxu0 0
        %389 = vmatprep.subr.bf16.mxu0 0
        %390 = vmatpush1.bf16.msra.mxu0 0
        %391 = vmatprep.subr.bf16.mxu0 0
        %392 = vmatpush1.bf16.msra.mxu0 0
        %393 = vmatprep.subr.bf16.mxu0 0
        %394 = vmatpush1.bf16.msra.mxu0 0
        %395 = vmatprep.subr.bf16.mxu0 0
        %396 = vmatpush1.bf16.msra.mxu0 0
        %397 = vmatprep.subr.bf16.mxu0 0
        %398 = vmatpush1.bf16.msra.mxu0 0
        %399 = vmatprep.subr.bf16.mxu0 0
        %400 = vmatpush1.bf16.msra.mxu0 0
        %401 = vmatprep.subr.bf16.mxu0 0
        %402 = vmatpush1.bf16.msra.mxu0 0
        %403 = vmatprep.subr.bf16.mxu0 0
        %404 = vmatpush1.bf16.msra.mxu0 0
        %405 = vmatprep.subr.bf16.mxu0 0
        %406 = vmatpush1.bf16.msra.mxu0 0
        %407 = vmatprep.subr.bf16.mxu0 0
        %408 = vmatpush1.bf16.msra.mxu0 0
        %409 = vmatprep.subr.bf16.mxu0 0
        %410 = vmatpush1.bf16.msra.mxu0 0
        %411 = vmatprep.subr.bf16.mxu0 0
        %412 = vmatpush1.bf16.msra.mxu0 0
        %413 = vmatprep.mubr.bf16.mxu0 0
        %414 = vmatmul.mubr.bf16.gmra.mrb[0].mxu0 %v372
        %v415 = vpop.f32.mrb[0].mxu0
        %v416 = vadd.f32 %v358, %v415
        %v417 = vpop.f32.mrb[0].mxu0
        %v418 = vadd.f32 %v358, %v417
        %v419 = vpop.f32.mrb[0].mxu0
        %v420 = vadd.f32 %v363, %v419
        %v421 = vpop.f32.mrb[0].mxu0
        %v422 = vadd.f32 %v363, %v421
        %423 = vdwg.mxu0
        %v424 = vlaneseq
        %v425 = vand.u32 %v424, 127
        %v426 = vadd.s32 %v425, 128
        %vm427 = vcmp.lt.s32.totalorder %v425, 0
        %v428 = vsub.s32 0, %v425
        %v429 = vsel %vm427, %v428, %v425
        %v430 = vshrl.u32 %v429, 4
        %v431 = vand.u32 %v429, 15
        %v432 = vsub.s32 0, %v431
        %v433 = vsel %vm427, %v432, %v431
        %vm434 = vcmp.lt.s32.totalorder %v426, 0
        %v435 = vsub.s32 0, %v426
        %v436 = vsel %vm434, %v435, %v426
        %v437 = vshrl.u32 %v436, 4
        %v438 = vand.u32 %v436, 15
        %v439 = vsub.s32 0, %v438
        %v440 = vsel %vm434, %v439, %v438
        %vm441 = vcmp.ne.s32.totalorder %v433, 0
        %vm442 = vcmp.ne.s32.totalorder %v440, 0
        %vm443 = vcmp.lt.s32.totalorder %v433, 0
        %vm444 = vcmp.lt.s32.totalorder %v440, 0
        %vm445 = vmand %vm443, %vm441
        %vm446 = vmand %vm444, %vm442
        %v447 = vadd.s32 %v433, 16
        %v448 = vadd.s32 %v440, 16
        %v449 = vsel %vm445, %v447, %v433
        %v450 = vsel %vm446, %v448, %v440
        %vm451 = vcmp.ge.s32.totalorder %v425, 16
        %vm452 = vcmp.ge.s32.totalorder %v426, 16
        %vm453 = vcmp.lt.s32.totalorder %v425, 240
        %vm454 = vcmp.lt.s32.totalorder %v426, 240
        %vm455 = vcmp.ge.s32.totalorder %v449, 1
        %vm456 = vcmp.ge.s32.totalorder %v450, 1
        %vm457 = vcmp.le.s32.totalorder %v449, 14
        %vm458 = vcmp.le.s32.totalorder %v450, 14
        %459 = vrot.lane.b32.xlu0 %v347, 17
        %v460 = vpop.permute.xlu0 %459
        %461 = vrot.lane.b32.xlu0 %v348, 17
        %v462 = vpop.permute.xlu0 %461
        %vm463 = vcmp.lt.s32.totalorder %v425, 17
        %v464 = vsel %vm463, %v460, %v462
        %v465 = vsel %vm463, %v462, %v460
        %vm466 = vmand %vm451, %vm455
        %vm467 = vmand %vm452, %vm456
        %v468 = vsel %vm466, 1, 0
        %v469 = vsel %vm467, 1, 0
        %vm470 = vcmp.eq.s32.totalorder %v468, 1
        %vm471 = vcmp.eq.s32.totalorder %v469, 1
        %v472 = vsel %vm470, %v465, 0.0
        %v473 = vsel %vm471, %v464, 0.0
        %474 = vrot.lane.b32.xlu0 %v347, 16
        %v475 = vpop.permute.xlu0 %474
        %476 = vrot.lane.b32.xlu0 %v348, 16
        %v477 = vpop.permute.xlu0 %476
        %vm478 = vcmp.lt.s32.totalorder %v425, 16
        %v479 = vsel %vm478, %v475, %v477
        %v480 = vsel %vm478, %v477, %v475
        %v481 = vsel %vm451, 1, 0
        %v482 = vsel %vm452, 1, 0
        %vm483 = vcmp.eq.s32.totalorder %v481, 1
        %vm484 = vcmp.eq.s32.totalorder %v482, 1
        %v485 = vsel %vm483, %v480, 0.0
        %v486 = vsel %vm484, %v479, 0.0
        %487 = vrot.lane.b32.xlu0 %v347, 15
        %v488 = vpop.permute.xlu0 %487
        %489 = vrot.lane.b32.xlu0 %v348, 15
        %v490 = vpop.permute.xlu0 %489
        %vm491 = vcmp.lt.s32.totalorder %v425, 15
        %v492 = vsel %vm491, %v488, %v490
        %v493 = vsel %vm491, %v490, %v488
        %vm494 = vmand %vm451, %vm457
        %vm495 = vmand %vm452, %vm458
        %v496 = vsel %vm494, 1, 0
        %v497 = vsel %vm495, 1, 0
        %vm498 = vcmp.eq.s32.totalorder %v496, 1
        %vm499 = vcmp.eq.s32.totalorder %v497, 1
        %v500 = vsel %vm498, %v493, 0.0
        %v501 = vsel %vm499, %v492, 0.0
        %502 = vrot.lane.b32.xlu0 %v347, 1
        %v503 = vpop.permute.xlu0 %502
        %504 = vrot.lane.b32.xlu0 %v348, 1
        %v505 = vpop.permute.xlu0 %504
        %vm506 = vcmp.lt.s32.totalorder %v425, 1
        %v507 = vsel %vm506, %v503, %v505
        %v508 = vsel %vm506, %v505, %v503
        %v509 = vsel %vm455, 1, 0
        %v510 = vsel %vm456, 1, 0
        %vm511 = vcmp.eq.s32.totalorder %v509, 1
        %vm512 = vcmp.eq.s32.totalorder %v510, 1
        %v513 = vsel %vm511, %v508, 0.0
        %v514 = vsel %vm512, %v507, 0.0
        %515 = vrot.lane.b32.xlu0 %v347, 127
        %v516 = vpop.permute.xlu0 %515
        %517 = vrot.lane.b32.xlu0 %v348, 127
        %v518 = vpop.permute.xlu0 %517
        %vm519 = vcmp.lt.s32.totalorder %v425, 127
        %v520 = vsel %vm519, %v516, %v518
        %v521 = vsel %vm519, %v518, %v516
        %v522 = vsel %vm457, 1, 0
        %v523 = vsel %vm458, 1, 0
        %vm524 = vcmp.eq.s32.totalorder %v522, 1
        %vm525 = vcmp.eq.s32.totalorder %v523, 1
        %v526 = vsel %vm524, %v520, 0.0
        %v527 = vsel %vm525, %v521, 0.0
        %528 = vrot.lane.b32.xlu0 %v347, 113
        %v529 = vpop.permute.xlu0 %528
        %530 = vrot.lane.b32.xlu0 %v348, 113
        %v531 = vpop.permute.xlu0 %530
        %vm532 = vcmp.lt.s32.totalorder %v425, 113
        %v533 = vsel %vm532, %v529, %v531
        %v534 = vsel %vm532, %v531, %v529
        %vm535 = vmand %vm453, %vm455
        %vm536 = vmand %vm454, %vm456
        %v537 = vsel %vm535, 1, 0
        %v538 = vsel %vm536, 1, 0
        %vm539 = vcmp.eq.s32.totalorder %v537, 1
        %vm540 = vcmp.eq.s32.totalorder %v538, 1
        %v541 = vsel %vm539, %v533, 0.0
        %v542 = vsel %vm540, %v534, 0.0
        %543 = vrot.lane.b32.xlu0 %v347, 112
        %v544 = vpop.permute.xlu0 %543
        %545 = vrot.lane.b32.xlu0 %v348, 112
        %v546 = vpop.permute.xlu0 %545
        %vm547 = vcmp.lt.s32.totalorder %v425, 112
        %v548 = vsel %vm547, %v544, %v546
        %v549 = vsel %vm547, %v546, %v544
        %v550 = vsel %vm453, 1, 0
        %v551 = vsel %vm454, 1, 0
        %vm552 = vcmp.eq.s32.totalorder %v550, 1
        %vm553 = vcmp.eq.s32.totalorder %v551, 1
        %v554 = vsel %vm552, %v548, 0.0
        %v555 = vsel %vm553, %v549, 0.0
        %556 = vrot.lane.b32.xlu0 %v347, 111
        %v557 = vpop.permute.xlu0 %556
        %558 = vrot.lane.b32.xlu0 %v348, 111
        %v559 = vpop.permute.xlu0 %558
        %vm560 = vcmp.lt.s32.totalorder %v425, 111
        %v561 = vsel %vm560, %v557, %v559
        %v562 = vsel %vm560, %v559, %v557
        %vm563 = vmand %vm453, %vm457
        %vm564 = vmand %vm454, %vm458
        %v565 = vsel %vm563, 1, 0
        %v566 = vsel %vm564, 1, 0
        %vm567 = vcmp.eq.s32.totalorder %v565, 1
        %vm568 = vcmp.eq.s32.totalorder %v566, 1
        %v569 = vsel %vm567, %v561, 0.0
        %v570 = vsel %vm568, %v562, 0.0
        %v571 = vpack.c.bf16 %v485, %v472
        %v572 = vpack.c.bf16 %v486, %v473
        %v573 = vpack.c.bf16 %v513, %v500
        %v574 = vpack.c.bf16 %v514, %v501
        %v575 = vpack.c.bf16 %v526, %v347
        %v576 = vpack.c.bf16 %v527, %v348
        %v577 = vpack.c.bf16 %v554, %v541
        %v578 = vpack.c.bf16 %v555, %v542
        %v579 = vpack.c.bf16 %v569, %v569
        %v580 = vpack.c.bf16 %v570, %v570
        %v581 = vld [vmem:[%s3] sm:$0xf]
        %v582 = vld [vmem:[%s3 + $0x4] sm:$0xf]
        %v583 = vld [vmem:[%s6] sm:$0xff]
        %v584 = vld [vmem:[%s6 + $0x8] sm:$0xff]
        %586 = vset.pattern.permute.xlu0 0
        %587 = vperm.xlu0 %586, %v583
        %v588 = vpop.permute.xlu0 %587
        %591 = vset.pattern.permute.xlu0 0
        %592 = vperm.xlu0 %591, %v584
        %v593 = vpop.permute.xlu0 %592
        %v597 = vunpack.c.l.b16 %v581
        %v598 = vunpack.c.l.b16 %v582
        %v599 = vpack.c.b16 %v598, %v597
        %vm600 = vcmask 588800
        %v602 = vsel %vm600, %v599, 0
        %v605 = vsel %vm374, %v579, 0
        %v608 = vsel %vm374, %v580, 0
        %610 = vmatprep.subr.bf16.mxu0 %v572
        %611 = vmatpush1.bf16.msra.mxu0 %v571
        %612 = vmatprep.subr.bf16.mxu0 %v574
        %613 = vmatpush1.bf16.msra.mxu0 %v573
        %614 = vmatprep.subr.bf16.mxu0 %v576
        %615 = vmatpush1.bf16.msra.mxu0 %v575
        %616 = vmatprep.subr.bf16.mxu0 %v578
        %617 = vmatpush1.bf16.msra.mxu0 %v577
        %618 = vmatprep.subr.bf16.mxu0 %v608
        %619 = vmatpush1.bf16.msra.mxu0 %v605
        %620 = vmatprep.subr.bf16.mxu0 0
        %621 = vmatpush1.bf16.msra.mxu0 0
        %622 = vmatprep.subr.bf16.mxu0 0
        %623 = vmatpush1.bf16.msra.mxu0 0
        %624 = vmatprep.subr.bf16.mxu0 0
        %625 = vmatpush1.bf16.msra.mxu0 0
        %626 = vmatprep.subr.bf16.mxu0 0
        %627 = vmatpush1.bf16.msra.mxu0 0
        %628 = vmatprep.subr.bf16.mxu0 0
        %629 = vmatpush1.bf16.msra.mxu0 0
        %630 = vmatprep.subr.bf16.mxu0 0
        %631 = vmatpush1.bf16.msra.mxu0 0
        %632 = vmatprep.subr.bf16.mxu0 0
        %633 = vmatpush1.bf16.msra.mxu0 0
        %634 = vmatprep.subr.bf16.mxu0 0
        %635 = vmatpush1.bf16.msra.mxu0 0
        %636 = vmatprep.subr.bf16.mxu0 0
        %637 = vmatpush1.bf16.msra.mxu0 0
        %638 = vmatprep.subr.bf16.mxu0 0
        %639 = vmatpush1.bf16.msra.mxu0 0
        %640 = vmatprep.subr.bf16.mxu0 0
        %641 = vmatpush1.bf16.msra.mxu0 0
        %642 = vmatprep.mubr.bf16.mxu0 0
        %643 = vmatmul.mubr.bf16.gmra.mrb[0].mxu0 %v602
        %v644 = vpop.f32.mrb[0].mxu0
        %v645 = vadd.f32 %v588, %v644
        %v646 = vpop.f32.mrb[0].mxu0
        %v647 = vadd.f32 %v588, %v646
        %v648 = vpop.f32.mrb[0].mxu0
        %v649 = vadd.f32 %v593, %v648
        %v650 = vpop.f32.mrb[0].mxu0
        %v651 = vadd.f32 %v593, %v650
        %652 = vdwg.mxu0
        %vm653 = vcmp.gt.f32.partialorder %v416, 0.0
        %vm654 = vcmp.gt.f32.partialorder %v418, 0.0
        %vm655 = vcmp.gt.f32.partialorder %v420, 0.0
        %vm656 = vcmp.gt.f32.partialorder %v422, 0.0
        %v657 = vmul.f32 %v416, 0.01
        %v658 = vmul.f32 %v418, 0.01
        %v659 = vmul.f32 %v420, 0.01
        %v660 = vmul.f32 %v422, 0.01
        %v661 = vsel %vm653, %v416, %v657
        %v662 = vsel %vm654, %v418, %v658
        %v663 = vsel %vm655, %v420, %v659
        %v664 = vsel %vm656, %v422, %v660
        %665 = vst [vmem:[%s271] sm:$0xff] %v661
        %666 = vst [vmem:[%s271 + $0x8] sm:$0xff] %v662
        %667 = vst [vmem:[%s271 + $0x10] sm:$0xff] %v663
        %668 = vst [vmem:[%s271 + $0x18] sm:$0xff] %v664
        %vm669 = vcmp.gt.f32.partialorder %v645, 0.0
        %vm670 = vcmp.gt.f32.partialorder %v647, 0.0
        %vm671 = vcmp.gt.f32.partialorder %v649, 0.0
        %vm672 = vcmp.gt.f32.partialorder %v651, 0.0
        %v673 = vmul.f32 %v645, 0.01
        %v674 = vmul.f32 %v647, 0.01
        %v675 = vmul.f32 %v649, 0.01
        %v676 = vmul.f32 %v651, 0.01
        %v677 = vsel %vm669, %v645, %v673
        %v678 = vsel %vm670, %v647, %v674
        %v679 = vsel %vm671, %v649, %v675
        %v680 = vsel %vm672, %v651, %v676
        %681 = vst [vmem:[%s271 + $0x20] sm:$0xff] %v677
        %682 = vst [vmem:[%s271 + $0x28] sm:$0xff] %v678
        %683 = vst [vmem:[%s271 + $0x30] sm:$0xff] %v679
        %684 = vst [vmem:[%s271 + $0x38] sm:$0xff] %v680
        %s685 = sand.u32 %s181, 1
        %s686 = scalar_lea.sflag [#allocation3], %s685
        %s687 = sand.u32 %s181, 1
        %s688 = smul.addr %s687, 64
        %s689 = scalar_lea.vmem [#allocation2], %s688
        // Predicated region
        $region49: #{tpu_custom_call.1} parent=47 // pred_check
          %p690 = pneg %p191
        $region50: #{tpu_custom_call.1} parent=47 // pred_check_branch
          %692 = sbr.rel (%p690) target = $region52
        $region51: #{tpu_custom_call.1} parent=47 // pred_region
          %s694 = ssub.s32 1024, 1024
          %695 = vsyncadd %s686, %s694
          %s696 = smul.addr %s21, 8
          %s697 = smul.addr %s696, 128
          %s698 = scalar_lea.hbm %s7, %s697
          %s699 = sshll.u32 %s689, 4
          %s700 = int_to_ptr.vmem [resolvable:$true] %s699
          %705 = dma.vmem_to_hbm [thread:$0]  %s700, 1024, %s698, %s686, 256, 256, 16
        $region52: #{tpu_custom_call.1} parent=47 // pred_fallthru
          _
      $region48: #{tpu_custom_call.1} parent=5 // pred_fallthru
        _
      %p706 = scmp.le.s32.totalorder 2, %s16
      // Predicated region
      $region53: #{tpu_custom_call.1} parent=5 // pred_check
        %p707 = pneg %p706
      $region54: #{tpu_custom_call.1} parent=5 // pred_check_branch
        %709 = sbr.rel (%p707) target = $region56
      $region55: #{tpu_custom_call.1} parent=5 // pred_region
        %s710 = ssub.s32 %s16, 2
        // Predicated region
        $region57: #{tpu_custom_call.1} parent=55 // pred_check
          %p711 = pneg %p197
        $region58: #{tpu_custom_call.1} parent=55 // pred_check_branch
          %713 = sbr.rel (%p711) target = $region60
        $region59: #{tpu_custom_call.1} parent=55 // pred_region
          %s714 = sand.u32 %s182, 1
          %s715 = scalar_lea.sflag [#allocation3], %s714
          %s716 = sand.u32 %s182, 1
          %s717 = smul.addr %s716, 64
          %s718 = scalar_lea.vmem [#allocation2], %s717
          %719 = dma.done %s715, 1024
        $region60: #{tpu_custom_call.1} parent=55 // pred_fallthru
          _
      $region56: #{tpu_custom_call.1} parent=5 // pred_fallthru
        _
    $region6: #{tpu_custom_call.1} parent=1 // loop_footer
      %s20 = sadd.s32 1, %s16
    $region7: #{tpu_custom_call.1} parent=1 // loop_footer_branch
      %15 = sbr.rel target = $region3
    $region8: #{tpu_custom_call.1} parent=1 // loop_exit
      _
    %720 = vsyncpa [#allocation3], 1
    %s721 = scalar_lea.sflag [#allocation3], 1
    %722 = vsyncpa %s721, 1

</llo_original>
